<compile_context>
chip_gen: v7x
topology: tpu7x:2x2x1
jax: 0.10.0
libtpu: 0.0.40
codegen_flags: <defaults>
</compile_context>

<pallas_src>
import jax
import jax.numpy as jnp
from jax.experimental import pallas as pl
from jax.experimental.pallas import tpu as pltpu


def _round_up(x, m):
    return ((x + m - 1) // m) * m


def _vmem_limit_bytes():
    # Budget against the chip's real VMEM (v5e/v6e: 128 MiB, v7x: 64 MiB).
    try:
        cap = int(pltpu.get_tpu_info().vmem_capacity_bytes)
    except Exception:
        cap = 64 * 1024 * 1024          # conservative: v7x per-core VMEM
    return min((cap * 3) // 4, 96 * 1024 * 1024)


def _pick_tb(B, S, H, O_pad, budget_bytes):
    """Largest batch tile (multiple of 8, <=256) whose double-buffered blocks
    fit the VMEM budget.  Keeps >=2 grid steps when B is big enough so the
    'parallel' batch axis can be sharded across v7x's two TensorCores."""
    tb = min(256, _round_up(B, 8))
    if B >= 16:
        tb = min(tb, _round_up((B + 1) // 2, 8))
    # Weights: conservatively assume double-buffered (bf16 matrices, f32 bias).
    weight_bytes = 2 * (2 * H * H * 2 + H * O_pad * 2 + H * 4 + O_pad * 4)

    def fits(t):
        per_step = 2 * (t * S * H * 4 + t * H * 4 + t * O_pad * 4)
        return per_step + weight_bytes <= budget_bytes

    while tb > 8 and not fits(tb):
        tb -= 8
    return tb


def attn_unit_kernel(enc_ref, dec_ref, wt_att_ref, b_att_ref,
                     wt_out_ref, b_out_ref, out_ref):
    enc = enc_ref[...]                                          # (TB, S, H) f32
    dec = dec_ref[...]                                          # (TB, H)    f32

    # dot = bmm(enc_s_top, dec_s_top.unsqueeze(2)).squeeze(2) -> (TB, S)
    # VPU mul + lane reduce; batch rows fill the sublanes.
    # TODO(synk): at production S*H, chunk this over S (online softmax) to
    # bound the (TB, S, H) temporaries and vreg/VMEM pressure.
    scores = jnp.sum(enc * dec[:, None, :], axis=2)             # (TB, S)

    # attention = softmax(scores, dim=1)  (over the source-sequence axis)
    m = jnp.max(scores, axis=1, keepdims=True)
    p = jnp.exp(scores - m)
    attn = p * pl.reciprocal(jnp.sum(p, axis=1, keepdims=True), approx=True)

    # enc_attention = bmm(enc.permute(0,2,1), attention).squeeze(2) -> (TB, H)
    ctx = jnp.sum(enc * attn[:, :, None], axis=1)               # (TB, H)

    # hid = tanh(linear_att(cat((ctx, dec), 1)))
    # Single fused K=2H MXU dot (bf16 operands, f32 accumulation); bias add
    # and tanh stay in f32.
    x = jnp.concatenate([ctx, dec], axis=1).astype(jnp.bfloat16)  # (TB, 2H)
    hid = jnp.tanh(
        jnp.dot(x, wt_att_ref[...], preferred_element_type=jnp.float32)
        + b_att_ref[...])                                        # (TB, H) f32

    # dropout -> identity (inference).  h2y = linear_out(hid);
    # pred = logsoftmax(h2y, dim=1).  Padded output columns carry a -1e30
    # bias (added in f32) so they vanish from the exact log-sum-exp.
    # TODO(synk): for vocab-sized O, stream W_out over an inner "arbitrary"
    # O grid axis with an online log-sum-exp instead of one resident slab.
    h2y = (jnp.dot(hid.astype(jnp.bfloat16), wt_out_ref[...],
                   preferred_element_type=jnp.float32)
           + b_out_ref[...])                                     # (TB, O_pad)
    mo = jnp.max(h2y, axis=1, keepdims=True)
    z = h2y - mo
    lse = jnp.log(jnp.sum(jnp.exp(z), axis=1, keepdims=True))
    out_ref[...] = z - lse


def attn_unit_forward(enc_s_top, dec_s_top, enc_2, params):
    # enc_2 is intentionally unused (dead branch in the torch module).
    del enc_2
    B, S, H = enc_s_top.shape
    O = params["w_out"].shape[0]

    O_pad = _round_up(O, 128)          # lane-dense output slab
    NEG = -1e30
    vmem_limit = _vmem_limit_bytes()
    TB = _pick_tb(B, S, H, O_pad, (vmem_limit * 3) // 4)
    B_pad = _round_up(B, TB)

    enc_p, dec_p = enc_s_top, dec_s_top
    if B_pad != B:
        enc_p = jnp.pad(enc_s_top, ((0, B_pad - B), (0, 0), (0, 0)))
        dec_p = jnp.pad(dec_s_top, ((0, B_pad - B), (0, 0)))
    # TODO(synk): at production (B, S, H) store enc/dec in bf16 in HBM to
    # halve the dominant DMA traffic (upcast after load); kept f32 here for
    # numerical parity with the torch module at toy sizes.

    # Pre-transpose / pad / cast weights once in XLA, outside the kernel.
    wt_att = params["w_att"].T.astype(jnp.bfloat16)              # (2H, H)
    b_att = params["b_att"].reshape(1, H).astype(jnp.float32)
    wt_out = jnp.pad(params["w_out"].T,
                     ((0, 0), (0, O_pad - O))).astype(jnp.bfloat16)  # (H, O_pad)
    b_out = jnp.pad(params["b_out"], (0, O_pad - O),
                    constant_values=NEG).reshape(1, O_pad).astype(jnp.float32)

    def run(single_buffer_weights):
        # Constant weights/biases: block index never changes, so single
        # buffering halves their VMEM footprint.
        w_kw = ({"pipeline_mode": pl.Buffered(1)}
                if single_buffer_weights else {})
        grid = (B_pad // TB,)
        cost = pl.CostEstimate(
            flops=B_pad * (4 * S * H + 2 * (2 * H) * H + 2 * H * O_pad),
            transcendentals=B_pad * (S + H + O_pad),
            bytes_accessed=((enc_p.size + dec_p.size + B_pad * O_pad) * 4
                            + (wt_att.size + wt_out.size) * 2
                            + (b_att.size + b_out.size) * 4))
        return pl.pallas_call(
            attn_unit_kernel,
            out_shape=jax.ShapeDtypeStruct((B_pad, O_pad), jnp.float32),
            grid_spec=pltpu.PrefetchScalarGridSpec(
                num_scalar_prefetch=0,
                grid=grid,
                in_specs=[
                    pl.BlockSpec((TB, S, H), lambda b: (b, 0, 0)),      # enc
                    pl.BlockSpec((TB, H),    lambda b: (b, 0)),         # dec
                    pl.BlockSpec((2 * H, H), lambda b: (0, 0), **w_kw),  # W_att^T (bf16)
                    pl.BlockSpec((1, H),     lambda b: (0, 0), **w_kw),  # b_att
                    pl.BlockSpec((H, O_pad), lambda b: (0, 0), **w_kw),  # W_out^T (bf16)
                    pl.BlockSpec((1, O_pad), lambda b: (0, 0), **w_kw),  # b_out (-1e30 pad)
                ],
                out_specs=pl.BlockSpec((TB, O_pad), lambda b: (b, 0)),
            ),
            compiler_params=pltpu.CompilerParams(
                dimension_semantics=("parallel",),
                vmem_limit_bytes=vmem_limit),
            cost_estimate=cost,
        )(enc_p, dec_p, wt_att, b_att, wt_out, b_out)

    try:
        out = jax.block_until_ready(run(single_buffer_weights=True))
    except Exception:
        # pipeline_mode=pl.Buffered(1) support varies across jax versions;
        # fall back to default double-buffered weight specs (same kernel,
        # identical results, slightly larger VMEM footprint).
        out = run(single_buffer_weights=False)

    return out[:B, :O]


def attn_unit_reference(enc_s_top, dec_s_top, params):
    # Pure-JAX f32 reference of the (live) torch forward path.
    scores = jnp.einsum("bsh,bh->bs", enc_s_top, dec_s_top)
    attn = jax.nn.softmax(scores, axis=1)
    ctx = jnp.einsum("bsh,bs->bh", enc_s_top, attn)
    x = jnp.concatenate([ctx, dec_s_top], axis=1)
    hid = jnp.tanh(x @ params["w_att"].T + params["b_att"])
    h2y = hid @ params["w_out"].T + params["b_out"]
    return jax.nn.log_softmax(h2y, axis=1)


if __name__ == "__main__":
    B, S, H, O = 2, 8, 32, 16

    key = jax.random.PRNGKey(0)
    k_enc, k_dec, k_enc2, k_wa, k_ba, k_wo, k_bo = jax.random.split(key, 7)

    enc_s_top = jax.random.normal(k_enc, (B, S, H), dtype=jnp.float32)
    dec_s_top = jax.random.normal(k_dec, (B, H), dtype=jnp.float32)
    enc_2 = jax.random.normal(k_enc2, (B, S, H), dtype=jnp.float32)  # unused

    params = {
        "w_att": 0.1 * jax.random.normal(k_wa, (H, 2 * H), dtype=jnp.float32),
        "b_att": 0.1 * jax.random.normal(k_ba, (H,), dtype=jnp.float32),
        "w_out": 0.1 * jax.random.normal(k_wo, (O, H), dtype=jnp.float32),
        "b_out": 0.1 * jax.random.normal(k_bo, (O,), dtype=jnp.float32),
    }

    pred = attn_unit_forward(enc_s_top, dec_s_top, enc_2, params)
    pred = jax.block_until_ready(pred)

    ref = attn_unit_reference(enc_s_top, dec_s_top, params)
    assert pred.shape == (B, O)
    # bf16 MXU operands (f32 accumulation) + approx reciprocal in the
    # attention softmax -> compare against the f32 reference with a bf16-level
    # tolerance; the log-softmax tail is computed exactly in f32.
    assert jnp.allclose(pred, ref, atol=2e-2, rtol=2e-2), "mismatch vs reference"

    print("KERNEL_OK")
</pallas_src>

<mosaic_0001>
module attributes {stable_mosaic.version = 11 : i64} {
  func.func @attn_unit_kernel(%arg0: i32, %arg1: memref<8x8x32xf32, #tpu.memory_space<vmem>>, %arg2: memref<8x32xf32, #tpu.memory_space<vmem>>, %arg3: memref<64x32xbf16, #tpu.memory_space<vmem>>, %arg4: memref<1x32xf32, #tpu.memory_space<vmem>>, %arg5: memref<32x128xbf16, #tpu.memory_space<vmem>>, %arg6: memref<1x128xf32, #tpu.memory_space<vmem>>, %arg7: memref<8x128xf32, #tpu.memory_space<vmem>>) attributes {dimension_semantics = [#tpu.dimension_semantics<parallel>], iteration_bounds = array<i64: 1>, scalar_prefetch = 0 : i64, scratch_operands = 0 : i64, tpu.core_type = #tpu.core_type<tc>, window_params = [{transform_indices = @transform_0, window_bounds = array<i64: 8, 8, 32>}, {transform_indices = @transform_1, window_bounds = array<i64: 8, 32>}, {pipeline_mode = #tpu.pipeline_mode<synchronous>, transform_indices = @transform_2, window_bounds = array<i64: 64, 32>}, {pipeline_mode = #tpu.pipeline_mode<synchronous>, transform_indices = @transform_3, window_bounds = array<i64: 1, 32>}, {pipeline_mode = #tpu.pipeline_mode<synchronous>, transform_indices = @transform_4, window_bounds = array<i64: 32, 128>}, {pipeline_mode = #tpu.pipeline_mode<synchronous>, transform_indices = @transform_5, window_bounds = array<i64: 1, 128>}, {transform_indices = @transform_6, window_bounds = array<i64: 8, 128>}]} {
    %c0 = arith.constant 0 : index
    %c0_0 = arith.constant 0 : index
    %c0_1 = arith.constant 0 : index
    %0 = vector.load %arg1[%c0, %c0_0, %c0_1] : memref<8x8x32xf32, #tpu.memory_space<vmem>>, vector<8x8x32xf32>
    %c0_2 = arith.constant 0 : index
    %c0_3 = arith.constant 0 : index
    %1 = vector.load %arg2[%c0_2, %c0_3] : memref<8x32xf32, #tpu.memory_space<vmem>>, vector<8x32xf32>
    %2 = vector.shape_cast %1 : vector<8x32xf32> to vector<8x1x32xf32>
    %3 = vector.broadcast %2 : vector<8x1x32xf32> to vector<8x8x32xf32>
    %4 = arith.mulf %0, %3 : vector<8x8x32xf32>
    %cst = arith.constant dense<0.000000e+00> : vector<8x8xf32>
    %5 = vector.multi_reduction <add>, %4, %cst [2] : vector<8x8x32xf32> to vector<8x8xf32>
    %cst_4 = arith.constant dense<0xFF800000> : vector<8xf32>
    %6 = vector.multi_reduction <maximumf>, %5, %cst_4 [1] : vector<8x8xf32> to vector<8xf32>
    %7 = vector.shape_cast %6 : vector<8xf32> to vector<8x1xf32>
    %8 = vector.broadcast %7 : vector<8x1xf32> to vector<8x8xf32>
    %9 = arith.subf %5, %8 : vector<8x8xf32>
    %10 = math.exp %9 : vector<8x8xf32>
    %cst_5 = arith.constant dense<0.000000e+00> : vector<8xf32>
    %11 = vector.multi_reduction <add>, %10, %cst_5 [1] : vector<8x8xf32> to vector<8xf32>
    %12 = vector.shape_cast %11 : vector<8xf32> to vector<8x1xf32>
    %13 = tpu.reciprocal %12 {approx = true} : vector<8x1xf32> -> vector<8x1xf32>
    %14 = vector.broadcast %13 : vector<8x1xf32> to vector<8x8xf32>
    %15 = arith.mulf %10, %14 : vector<8x8xf32>
    %16 = vector.shape_cast %15 : vector<8x8xf32> to vector<8x8x1xf32>
    %17 = vector.broadcast %16 : vector<8x8x1xf32> to vector<8x8x32xf32>
    %18 = arith.mulf %0, %17 : vector<8x8x32xf32>
    %cst_6 = arith.constant dense<0.000000e+00> : vector<8x32xf32>
    %19 = vector.multi_reduction <add>, %18, %cst_6 [1] : vector<8x8x32xf32> to vector<8x32xf32>
    %20 = tpu.concatenate %19, %1 in 1 : vector<8x32xf32>, vector<8x32xf32> -> vector<8x64xf32>
    %21 = arith.truncf %20 : vector<8x64xf32> to vector<8x64xbf16>
    %c0_7 = arith.constant 0 : index
    %c0_8 = arith.constant 0 : index
    %22 = vector.load %arg3[%c0_7, %c0_8] : memref<64x32xbf16, #tpu.memory_space<vmem>>, vector<64x32xbf16>
    %cst_9 = arith.constant dense<0.000000e+00> : vector<8x32xf32>
    %23 = tpu.matmul %21, %22, %cst_9 {dimension_numbers = #tpu.dot_dimension_numbers<[1], [0], [0], [1], [0, 0, 1, 1], [], []>} : vector<8x64xbf16>, vector<64x32xbf16>, vector<8x32xf32> -> vector<8x32xf32>
    %c0_10 = arith.constant 0 : index
    %c0_11 = arith.constant 0 : index
    %24 = vector.load %arg4[%c0_10, %c0_11] : memref<1x32xf32, #tpu.memory_space<vmem>>, vector<1x32xf32>
    %25 = vector.broadcast %24 : vector<1x32xf32> to vector<8x32xf32>
    %26 = arith.addf %23, %25 : vector<8x32xf32>
    %27 = math.tanh %26 : vector<8x32xf32>
    %28 = arith.truncf %27 : vector<8x32xf32> to vector<8x32xbf16>
    %c0_12 = arith.constant 0 : index
    %c0_13 = arith.constant 0 : index
    %29 = vector.load %arg5[%c0_12, %c0_13] : memref<32x128xbf16, #tpu.memory_space<vmem>>, vector<32x128xbf16>
    %cst_14 = arith.constant dense<0.000000e+00> : vector<8x128xf32>
    %30 = tpu.matmul %28, %29, %cst_14 {dimension_numbers = #tpu.dot_dimension_numbers<[1], [0], [0], [1], [0, 0, 1, 1], [], []>} : vector<8x32xbf16>, vector<32x128xbf16>, vector<8x128xf32> -> vector<8x128xf32>
    %c0_15 = arith.constant 0 : index
    %c0_16 = arith.constant 0 : index
    %31 = vector.load %arg6[%c0_15, %c0_16] : memref<1x128xf32, #tpu.memory_space<vmem>>, vector<1x128xf32>
    %32 = vector.broadcast %31 : vector<1x128xf32> to vector<8x128xf32>
    %33 = arith.addf %30, %32 : vector<8x128xf32>
    %cst_17 = arith.constant dense<0xFF800000> : vector<8xf32>
    %34 = vector.multi_reduction <maximumf>, %33, %cst_17 [1] : vector<8x128xf32> to vector<8xf32>
    %35 = vector.shape_cast %34 : vector<8xf32> to vector<8x1xf32>
    %36 = vector.broadcast %35 : vector<8x1xf32> to vector<8x128xf32>
    %37 = arith.subf %33, %36 : vector<8x128xf32>
    %38 = math.exp %37 : vector<8x128xf32>
    %cst_18 = arith.constant dense<0.000000e+00> : vector<8xf32>
    %39 = vector.multi_reduction <add>, %38, %cst_18 [1] : vector<8x128xf32> to vector<8xf32>
    %40 = vector.shape_cast %39 : vector<8xf32> to vector<8x1xf32>
    %41 = math.log %40 : vector<8x1xf32>
    %42 = vector.broadcast %41 : vector<8x1xf32> to vector<8x128xf32>
    %43 = arith.subf %37, %42 : vector<8x128xf32>
    %c0_19 = arith.constant 0 : index
    %c0_20 = arith.constant 0 : index
    %44 = vector.load %arg7[%c0_19, %c0_20] : memref<8x128xf32, #tpu.memory_space<vmem>>, vector<8x128xf32>
    tpu.vector_store %arg7[%c0_19, %c0_20], %43 {strides = array<i32>} : memref<8x128xf32, #tpu.memory_space<vmem>>, vector<8x128xf32>,
    return
  }
  func.func @transform_0(%arg0: i32) -> (i32, i32, i32) {
    %c0_i32 = arith.constant 0 : i32
    %c0_i32_0 = arith.constant 0 : i32
    %c0_i32_1 = arith.constant 0 : i32
    return %arg0, %c0_i32, %c0_i32_0 : i32, i32, i32
  }
  func.func @transform_1(%arg0: i32) -> (i32, i32) {
    %c0_i32 = arith.constant 0 : i32
    %c0_i32_0 = arith.constant 0 : i32
    return %arg0, %c0_i32 : i32, i32
  }
  func.func @transform_2(%arg0: i32) -> (i32, i32) {
    %c0_i32 = arith.constant 0 : i32
    %c0_i32_0 = arith.constant 0 : i32
    %c0_i32_1 = arith.constant 0 : i32
    return %c0_i32, %c0_i32_0 : i32, i32
  }
  func.func @transform_3(%arg0: i32) -> (i32, i32) {
    %c0_i32 = arith.constant 0 : i32
    %c0_i32_0 = arith.constant 0 : i32
    %c0_i32_1 = arith.constant 0 : i32
    return %c0_i32, %c0_i32_0 : i32, i32
  }
  func.func @transform_4(%arg0: i32) -> (i32, i32) {
    %c0_i32 = arith.constant 0 : i32
    %c0_i32_0 = arith.constant 0 : i32
    %c0_i32_1 = arith.constant 0 : i32
    return %c0_i32, %c0_i32_0 : i32, i32
  }
  func.func @transform_5(%arg0: i32) -> (i32, i32) {
    %c0_i32 = arith.constant 0 : i32
    %c0_i32_0 = arith.constant 0 : i32
    %c0_i32_1 = arith.constant 0 : i32
    return %c0_i32, %c0_i32_0 : i32, i32
  }
  func.func @transform_6(%arg0: i32) -> (i32, i32) {
    %c0_i32 = arith.constant 0 : i32
    %c0_i32_0 = arith.constant 0 : i32
    return %arg0, %c0_i32 : i32, i32
  }
}

module attributes {stable_mosaic.version = 11 : i64} {
  func.func @attn_unit_kernel(%arg0: i32, %arg1: memref<8x8x32xf32, #tpu.memory_space<vmem>>, %arg2: memref<8x32xf32, #tpu.memory_space<vmem>>, %arg3: memref<64x32xbf16, #tpu.memory_space<vmem>>, %arg4: memref<1x32xf32, #tpu.memory_space<vmem>>, %arg5: memref<32x128xbf16, #tpu.memory_space<vmem>>, %arg6: memref<1x128xf32, #tpu.memory_space<vmem>>, %arg7: memref<8x128xf32, #tpu.memory_space<vmem>>) attributes {dimension_semantics = [#tpu.dimension_semantics<parallel>], iteration_bounds = array<i64: 1>, scalar_prefetch = 0 : i64, scratch_operands = 0 : i64, tpu.core_type = #tpu.core_type<tc>, window_params = [{transform_indices = @transform_0, window_bounds = array<i64: 8, 8, 32>}, {transform_indices = @transform_1, window_bounds = array<i64: 8, 32>}, {pipeline_mode = #tpu.pipeline_mode<synchronous>, transform_indices = @transform_2, window_bounds = array<i64: 64, 32>}, {pipeline_mode = #tpu.pipeline_mode<synchronous>, transform_indices = @transform_3, window_bounds = array<i64: 1, 32>}, {pipeline_mode = #tpu.pipeline_mode<synchronous>, transform_indices = @transform_4, window_bounds = array<i64: 32, 128>}, {pipeline_mode = #tpu.pipeline_mode<synchronous>, transform_indices = @transform_5, window_bounds = array<i64: 1, 128>}, {transform_indices = @transform_6, window_bounds = array<i64: 8, 128>}]} {
    %c0 = arith.constant 0 : index
    %c0_0 = arith.constant 0 : index
    %c0_1 = arith.constant 0 : index
    %0 = vector.load %arg1[%c0, %c0_0, %c0_1] : memref<8x8x32xf32, #tpu.memory_space<vmem>>, vector<8x8x32xf32>
    %c0_2 = arith.constant 0 : index
    %c0_3 = arith.constant 0 : index
    %1 = vector.load %arg2[%c0_2, %c0_3] : memref<8x32xf32, #tpu.memory_space<vmem>>, vector<8x32xf32>
    %2 = vector.shape_cast %1 : vector<8x32xf32> to vector<8x1x32xf32>
    %3 = vector.broadcast %2 : vector<8x1x32xf32> to vector<8x8x32xf32>
    %4 = arith.mulf %0, %3 : vector<8x8x32xf32>
    %cst = arith.constant dense<0.000000e+00> : vector<8x8xf32>
    %5 = vector.multi_reduction <add>, %4, %cst [2] : vector<8x8x32xf32> to vector<8x8xf32>
    %cst_4 = arith.constant dense<0xFF800000> : vector<8xf32>
    %6 = vector.multi_reduction <maximumf>, %5, %cst_4 [1] : vector<8x8xf32> to vector<8xf32>
    %7 = vector.shape_cast %6 : vector<8xf32> to vector<8x1xf32>
    %8 = vector.broadcast %7 : vector<8x1xf32> to vector<8x8xf32>
    %9 = arith.subf %5, %8 : vector<8x8xf32>
    %10 = math.exp %9 : vector<8x8xf32>
    %cst_5 = arith.constant dense<0.000000e+00> : vector<8xf32>
    %11 = vector.multi_reduction <add>, %10, %cst_5 [1] : vector<8x8xf32> to vector<8xf32>
    %12 = vector.shape_cast %11 : vector<8xf32> to vector<8x1xf32>
    %13 = tpu.reciprocal %12 {approx = true} : vector<8x1xf32> -> vector<8x1xf32>
    %14 = vector.broadcast %13 : vector<8x1xf32> to vector<8x8xf32>
    %15 = arith.mulf %10, %14 : vector<8x8xf32>
    %16 = vector.shape_cast %15 : vector<8x8xf32> to vector<8x8x1xf32>
    %17 = vector.broadcast %16 : vector<8x8x1xf32> to vector<8x8x32xf32>
    %18 = arith.mulf %0, %17 : vector<8x8x32xf32>
    %cst_6 = arith.constant dense<0.000000e+00> : vector<8x32xf32>
    %19 = vector.multi_reduction <add>, %18, %cst_6 [1] : vector<8x8x32xf32> to vector<8x32xf32>
    %20 = tpu.concatenate %19, %1 in 1 : vector<8x32xf32>, vector<8x32xf32> -> vector<8x64xf32>
    %21 = arith.truncf %20 : vector<8x64xf32> to vector<8x64xbf16>
    %c0_7 = arith.constant 0 : index
    %c0_8 = arith.constant 0 : index
    %22 = vector.load %arg3[%c0_7, %c0_8] : memref<64x32xbf16, #tpu.memory_space<vmem>>, vector<64x32xbf16>
    %cst_9 = arith.constant dense<0.000000e+00> : vector<8x32xf32>
    %23 = tpu.matmul %21, %22, %cst_9 {dimension_numbers = #tpu.dot_dimension_numbers<[1], [0], [0], [1], [0, 0, 1, 1], [], []>} : vector<8x64xbf16>, vector<64x32xbf16>, vector<8x32xf32> -> vector<8x32xf32>
    %c0_10 = arith.constant 0 : index
    %c0_11 = arith.constant 0 : index
    %24 = vector.load %arg4[%c0_10, %c0_11] : memref<1x32xf32, #tpu.memory_space<vmem>>, vector<1x32xf32>
    %25 = vector.broadcast %24 : vector<1x32xf32> to vector<8x32xf32>
    %26 = arith.addf %23, %25 : vector<8x32xf32>
    %27 = math.tanh %26 : vector<8x32xf32>
    %28 = arith.truncf %27 : vector<8x32xf32> to vector<8x32xbf16>
    %c0_12 = arith.constant 0 : index
    %c0_13 = arith.constant 0 : index
    %29 = vector.load %arg5[%c0_12, %c0_13] : memref<32x128xbf16, #tpu.memory_space<vmem>>, vector<32x128xbf16>
    %cst_14 = arith.constant dense<0.000000e+00> : vector<8x128xf32>
    %30 = tpu.matmul %28, %29, %cst_14 {dimension_numbers = #tpu.dot_dimension_numbers<[1], [0], [0], [1], [0, 0, 1, 1], [], []>} : vector<8x32xbf16>, vector<32x128xbf16>, vector<8x128xf32> -> vector<8x128xf32>
    %c0_15 = arith.constant 0 : index
    %c0_16 = arith.constant 0 : index
    %31 = vector.load %arg6[%c0_15, %c0_16] : memref<1x128xf32, #tpu.memory_space<vmem>>, vector<1x128xf32>
    %32 = vector.broadcast %31 : vector<1x128xf32> to vector<8x128xf32>
    %33 = arith.addf %30, %32 : vector<8x128xf32>
    %cst_17 = arith.constant dense<0xFF800000> : vector<8xf32>
    %34 = vector.multi_reduction <maximumf>, %33, %cst_17 [1] : vector<8x128xf32> to vector<8xf32>
    %35 = vector.shape_cast %34 : vector<8xf32> to vector<8x1xf32>
    %36 = vector.broadcast %35 : vector<8x1xf32> to vector<8x128xf32>
    %37 = arith.subf %33, %36 : vector<8x128xf32>
    %38 = math.exp %37 : vector<8x128xf32>
    %cst_18 = arith.constant dense<0.000000e+00> : vector<8xf32>
    %39 = vector.multi_reduction <add>, %38, %cst_18 [1] : vector<8x128xf32> to vector<8xf32>
    %40 = vector.shape_cast %39 : vector<8xf32> to vector<8x1xf32>
    %41 = math.log %40 : vector<8x1xf32>
    %42 = vector.broadcast %41 : vector<8x1xf32> to vector<8x128xf32>
    %43 = arith.subf %37, %42 : vector<8x128xf32>
    %c0_19 = arith.constant 0 : index
    %c0_20 = arith.constant 0 : index
    %44 = vector.load %arg7[%c0_19, %c0_20] : memref<8x128xf32, #tpu.memory_space<vmem>>, vector<8x128xf32>
    tpu.vector_store %arg7[%c0_19, %c0_20], %43 {strides = array<i32>} : memref<8x128xf32, #tpu.memory_space<vmem>>, vector<8x128xf32>,
    return
  }
  func.func @transform_0(%arg0: i32) -> (i32, i32, i32) {
    %c0_i32 = arith.constant 0 : i32
    %c0_i32_0 = arith.constant 0 : i32
    %c0_i32_1 = arith.constant 0 : i32
    return %arg0, %c0_i32, %c0_i32_0 : i32, i32, i32
  }
  func.func @transform_1(%arg0: i32) -> (i32, i32) {
    %c0_i32 = arith.constant 0 : i32
    %c0_i32_0 = arith.constant 0 : i32
    return %arg0, %c0_i32 : i32, i32
  }
  func.func @transform_2(%arg0: i32) -> (i32, i32) {
    %c0_i32 = arith.constant 0 : i32
    %c0_i32_0 = arith.constant 0 : i32
    %c0_i32_1 = arith.constant 0 : i32
    return %c0_i32, %c0_i32_0 : i32, i32
  }
  func.func @transform_3(%arg0: i32) -> (i32, i32) {
    %c0_i32 = arith.constant 0 : i32
    %c0_i32_0 = arith.constant 0 : i32
    %c0_i32_1 = arith.constant 0 : i32
    return %c0_i32, %c0_i32_0 : i32, i32
  }
  func.func @transform_4(%arg0: i32) -> (i32, i32) {
    %c0_i32 = arith.constant 0 : i32
    %c0_i32_0 = arith.constant 0 : i32
    %c0_i32_1 = arith.constant 0 : i32
    return %c0_i32, %c0_i32_0 : i32, i32
  }
  func.func @transform_5(%arg0: i32) -> (i32, i32) {
    %c0_i32 = arith.constant 0 : i32
    %c0_i32_0 = arith.constant 0 : i32
    %c0_i32_1 = arith.constant 0 : i32
    return %c0_i32, %c0_i32_0 : i32, i32
  }
  func.func @transform_6(%arg0: i32) -> (i32, i32) {
    %c0_i32 = arith.constant 0 : i32
    %c0_i32_0 = arith.constant 0 : i32
    return %arg0, %c0_i32 : i32, i32
  }
}

</mosaic_0001>

<llo_original>
// kernel: tpu_custom_call.1
$region0: #{tpu_custom_call.1}
  #allocation0 [shape = 'u32[]', space=smem, size = 0x4, offset = 0x4, fixed_abs, tag = 'smem constant byte address 0x4 - core index']
  #allocation1 [shape = 'u32[144,128]{1,0:T(1,128)}', space=vmem, size = 0x12000, scoped, tag = 'internal scratch']
  %s0 = inlined_call_operand.hbm [shape: f32[8,8,32], index: 0, kind: input, shape index: {}]
  %s1 = inlined_call_operand.vmem [shape: f32[8,32], index: 1, kind: input, shape index: {}]
  %s2 = inlined_call_operand.vmem [shape: bf16[64,32], index: 2, kind: input, shape index: {}]
  %s3 = inlined_call_operand.vmem [shape: f32[1,32], index: 3, kind: input, shape index: {}]
  %s4 = inlined_call_operand.vmem [shape: bf16[32,128], index: 4, kind: input, shape index: {}]
  %s5 = inlined_call_operand.vmem [shape: f32[1,128], index: 5, kind: input, shape index: {}]
  %s6 = inlined_call_operand.hbm [shape: f32[8,128], index: 6, kind: output, shape index: {}]
  %s7 = sld [smem:[#allocation0]]
  $region38: #{tpu_custom_call.1} parent=0
    _
  %s9 = ssub.s32 1, %s7
  %s10 = scalar_select 0, %s9, %s7
  $region1: #{tpu_custom_call.1} parent=0
    #allocation2 [shape = 'u8[32768]{0}', space=vmem, size = 0x8000, scoped, tag = 'input window, operand 0, single buffered']
    #allocation3 [shape = 's32[1]{0}', space=sflag, size = 0x4, scoped, tag = 'scoped memory for tpu_custom_call.1']
    #allocation4 [shape = 's32[1]{0}', space=sflag, size = 0x4, scoped, tag = 'scoped memory for tpu_custom_call.1']
    #allocation5 [shape = 'u8[4096]{0}', space=vmem, size = 0x1000, scoped, tag = 'output window, operand 0, single buffered']
    %11 = vsyncpa [#allocation3], 0
    %12 = vsyncpa [#allocation4], 0
    // Predicated region
    $region2: #{tpu_custom_call.1} parent=1 // pred_check
      _
    $region3: #{tpu_custom_call.1} parent=1 // pred_check_branch
      %14 = sbr.rel (0) target = $region5
    $region4: #{tpu_custom_call.1} parent=1 // pred_region
      %s16 = ssub.s32 1024, 1024
      %17 = vsyncadd [#allocation3], %s16
      %s18 = sshll.u32 [#allocation2], 4
      %s19 = int_to_ptr.vmem [resolvable:$true] %s18
      %24 = dma.hbm_to_vmem [thread:$0]  %s0, 1024, %s19, [#allocation3], 128, 128, 8
    $region5: #{tpu_custom_call.1} parent=1 // pred_fallthru
      _
    // Predicated region
    $region6: #{tpu_custom_call.1} parent=1 // pred_check
      _
    $region7: #{tpu_custom_call.1} parent=1 // pred_check_branch
      %26 = sbr.rel (0) target = $region9
    $region8: #{tpu_custom_call.1} parent=1 // pred_region
      _
    $region9: #{tpu_custom_call.1} parent=1 // pred_fallthru
      _
    // Predicated region
    $region10: #{tpu_custom_call.1} parent=1 // pred_check
      _
    $region11: #{tpu_custom_call.1} parent=1 // pred_check_branch
      %28 = sbr.rel (0) target = $region13
    $region12: #{tpu_custom_call.1} parent=1 // pred_region
      _
    $region13: #{tpu_custom_call.1} parent=1 // pred_fallthru
      _
    // Predicated region
    $region14: #{tpu_custom_call.1} parent=1 // pred_check
      _
    $region15: #{tpu_custom_call.1} parent=1 // pred_check_branch
      %30 = sbr.rel (0) target = $region17
    $region16: #{tpu_custom_call.1} parent=1 // pred_region
      _
    $region17: #{tpu_custom_call.1} parent=1 // pred_fallthru
      _
    // Predicated region
    $region18: #{tpu_custom_call.1} parent=1 // pred_check
      _
    $region19: #{tpu_custom_call.1} parent=1 // pred_check_branch
      %32 = sbr.rel (0) target = $region21
    $region20: #{tpu_custom_call.1} parent=1 // pred_region
      _
    $region21: #{tpu_custom_call.1} parent=1 // pred_fallthru
      _
    // Predicated region
    $region22: #{tpu_custom_call.1} parent=1 // pred_check
      _
    $region23: #{tpu_custom_call.1} parent=1 // pred_check_branch
      %34 = sbr.rel (0) target = $region25
    $region24: #{tpu_custom_call.1} parent=1 // pred_region
      _
    $region25: #{tpu_custom_call.1} parent=1 // pred_fallthru
      _
    // Predicated region
    $region26: #{tpu_custom_call.1} parent=1 // pred_check
      _
    $region27: #{tpu_custom_call.1} parent=1 // pred_check_branch
      %36 = sbr.rel (0) target = $region29
    $region28: #{tpu_custom_call.1} parent=1 // pred_region
      %37 = dma.done [#allocation3], 1024
    $region29: #{tpu_custom_call.1} parent=1 // pred_fallthru
      _
    %v39 = vld [vmem:[#allocation2] sm:$0xff]
    %v40 = vld [vmem:[#allocation2 + $0x8] sm:$0xff]
    %v41 = vld [vmem:[#allocation2 + $0x10] sm:$0xff]
    %v42 = vld [vmem:[#allocation2 + $0x18] sm:$0xff]
    %v43 = vld [vmem:[#allocation2 + $0x20] sm:$0xff]
    %v44 = vld [vmem:[#allocation2 + $0x28] sm:$0xff]
    %v45 = vld [vmem:[#allocation2 + $0x30] sm:$0xff]
    %v46 = vld [vmem:[#allocation2 + $0x38] sm:$0xff]
    %v47 = vld [vmem:[%s1] sm:$0xff]
    %v49 = vcombine.high %v47, %v47
    %v51 = vunpack.c.l.s4 1966171168
    %v52 = vunpack.c.0.s8 %v51
    %v53 = vlaneseq
    %v54 = vshrl.u32 %v53, 7
    %v55 = vsub.s32 %v52, %v54
    %v56 = vrot.slane %v47, %v55
    %v58 = vunpack.c.l.s4 1966171168
    %v59 = vunpack.c.0.s8 %v58
    %v60 = vlaneseq
    %v61 = vshrl.u32 %v60, 7
    %v62 = vsub.s32 %v59, %v61
    %v63 = vrot.slane %v49, %v62
    %v64 = vcombine.high %v56, %v56
    %v65 = vcombine.high %v63, %v63
    %v67 = vunpack.c.l.s4 1966171168
    %v68 = vunpack.c.0.s8 %v67
    %v69 = vlaneseq
    %v70 = vshrl.u32 %v69, 7
    %v71 = vsub.s32 %v68, %v70
    %v72 = vrot.slane %v56, %v71
    %v74 = vunpack.c.l.s4 1966171168
    %v75 = vunpack.c.0.s8 %v74
    %v76 = vlaneseq
    %v77 = vshrl.u32 %v76, 7
    %v78 = vsub.s32 %v75, %v77
    %v79 = vrot.slane %v63, %v78
    %v81 = vunpack.c.l.s4 1966171168
    %v82 = vunpack.c.0.s8 %v81
    %v83 = vlaneseq
    %v84 = vshrl.u32 %v83, 7
    %v85 = vsub.s32 %v82, %v84
    %v86 = vrot.slane %v64, %v85
    %v88 = vunpack.c.l.s4 1966171168
    %v89 = vunpack.c.0.s8 %v88
    %v90 = vlaneseq
    %v91 = vshrl.u32 %v90, 7
    %v92 = vsub.s32 %v89, %v91
    %v93 = vrot.slane %v65, %v92
    %v94 = vcombine.high %v72, %v72
    %v95 = vcombine.high %v79, %v79
    %v96 = vcombine.high %v86, %v86
    %v97 = vcombine.high %v93, %v93
    %v98 = vlaneseq
    %v99 = vshrl.u32 %v98, 7
    %v100 = vsub.s32 0, %v99
    %v101 = vrot.slane %v72, %v100
    %v102 = vlaneseq
    %v103 = vshrl.u32 %v102, 7
    %v104 = vsub.s32 0, %v103
    %v105 = vrot.slane %v86, %v104
    %v106 = vlaneseq
    %v107 = vshrl.u32 %v106, 7
    %v108 = vsub.s32 0, %v107
    %v109 = vrot.slane %v94, %v108
    %v110 = vlaneseq
    %v111 = vshrl.u32 %v110, 7
    %v112 = vsub.s32 0, %v111
    %v113 = vrot.slane %v96, %v112
    %v114 = vlaneseq
    %v115 = vshrl.u32 %v114, 7
    %v116 = vsub.s32 0, %v115
    %v117 = vrot.slane %v79, %v116
    %v118 = vlaneseq
    %v119 = vshrl.u32 %v118, 7
    %v120 = vsub.s32 0, %v119
    %v121 = vrot.slane %v93, %v120
    %v122 = vlaneseq
    %v123 = vshrl.u32 %v122, 7
    %v124 = vsub.s32 0, %v123
    %v125 = vrot.slane %v95, %v124
    %v126 = vlaneseq
    %v127 = vshrl.u32 %v126, 7
    %v128 = vsub.s32 0, %v127
    %v129 = vrot.slane %v97, %v128
    %v138 = vmul.f32 %v39, %v101
    %v139 = vmul.f32 %v40, %v105
    %v140 = vmul.f32 %v41, %v109
    %v141 = vmul.f32 %v42, %v113
    %v142 = vmul.f32 %v43, %v117
    %v143 = vmul.f32 %v44, %v121
    %v144 = vmul.f32 %v45, %v125
    %v145 = vmul.f32 %v46, %v129
    %vm146 = vcmask 261120
    %v147 = vsel %vm146, %v138, 0.0
    %148 = vadd.xlane.f32.xlu0 %v147
    %v149 = vpop.xlane.xlu0 %148
    %v150 = vsel %vm146, %v139, 0.0
    %151 = vadd.xlane.f32.xlu0 %v150
    %v152 = vpop.xlane.xlu0 %151
    %v153 = vsel %vm146, %v140, 0.0
    %154 = vadd.xlane.f32.xlu0 %v153
    %v155 = vpop.xlane.xlu0 %154
    %v156 = vsel %vm146, %v141, 0.0
    %157 = vadd.xlane.f32.xlu0 %v156
    %v158 = vpop.xlane.xlu0 %157
    %v159 = vsel %vm146, %v142, 0.0
    %160 = vadd.xlane.f32.xlu0 %v159
    %v161 = vpop.xlane.xlu0 %160
    %v162 = vsel %vm146, %v143, 0.0
    %163 = vadd.xlane.f32.xlu0 %v162
    %v164 = vpop.xlane.xlu0 %163
    %v165 = vsel %vm146, %v144, 0.0
    %166 = vadd.xlane.f32.xlu0 %v165
    %v167 = vpop.xlane.xlu0 %166
    %v168 = vsel %vm146, %v145, 0.0
    %169 = vadd.xlane.f32.xlu0 %v168
    %v170 = vpop.xlane.xlu0 %169
    %v179 = vlaneseq
    %v180 = vand.u32 %v179, 127
    %v181 = vlaneseq
    %v182 = vshrl.u32 %v181, 7
    %v183 = vsub.s32 %v180, %v182
    %v184 = vrot.slane %v149, %v183
    %v185 = vlaneseq
    %v186 = vshrl.u32 %v185, 7
    %v187 = vsub.s32 %v180, %v186
    %v188 = vrot.slane %v152, %v187
    %v189 = vlaneseq
    %v190 = vshrl.u32 %v189, 7
    %v191 = vsub.s32 %v180, %v190
    %v192 = vrot.slane %v155, %v191
    %v193 = vlaneseq
    %v194 = vshrl.u32 %v193, 7
    %v195 = vsub.s32 %v180, %v194
    %v196 = vrot.slane %v158, %v195
    %v197 = vlaneseq
    %v198 = vshrl.u32 %v197, 7
    %v199 = vsub.s32 %v180, %v198
    %v200 = vrot.slane %v161, %v199
    %v201 = vlaneseq
    %v202 = vshrl.u32 %v201, 7
    %v203 = vsub.s32 %v180, %v202
    %v204 = vrot.slane %v164, %v203
    %v205 = vlaneseq
    %v206 = vshrl.u32 %v205, 7
    %v207 = vsub.s32 %v180, %v206
    %v208 = vrot.slane %v167, %v207
    %v209 = vlaneseq
    %v210 = vshrl.u32 %v209, 7
    %v211 = vsub.s32 %v180, %v210
    %v212 = vrot.slane %v170, %v211
    %vm213 = vcmask 1041409
    %v214 = vsel %vm213, %v188, %v184
    %vm215 = vcmask 1042434
    %v216 = vsel %vm215, %v192, %v214
    %vm217 = vcmask 1043459
    %v218 = vsel %vm217, %v196, %v216
    %vm219 = vcmask 1044484
    %v220 = vsel %vm219, %v200, %v218
    %vm221 = vcmask 1045509
    %v222 = vsel %vm221, %v204, %v220
    %vm223 = vcmask 1046534
    %v224 = vsel %vm223, %v208, %v222
    %vm225 = vcmask 1047559
    %v226 = vsel %vm225, %v212, %v224
    %vm228 = vcmask 64512
    %v229 = vsel %vm228, %v226, -inf
    %230 = vmax.xlane.f32.xlu0 %v229
    %v231 = vpop.xlane.xlu0 %230
    %v233 = vlaneseq
    %v234 = vshrl.u32 %v233, 7
    %v235 = vsub.s32 0, %v234
    %v236 = vrot.slane %v231, %v235
    %v237 = vlaneseq
    %v238 = vshrl.u32 %v237, 7
    %v239 = vsub.s32 1, %v238
    %v240 = vrot.slane %v231, %v239
    %v241 = vlaneseq
    %v242 = vshrl.u32 %v241, 7
    %v243 = vsub.s32 2, %v242
    %v244 = vrot.slane %v231, %v243
    %v245 = vlaneseq
    %v246 = vshrl.u32 %v245, 7
    %v247 = vsub.s32 3, %v246
    %v248 = vrot.slane %v231, %v247
    %v249 = vlaneseq
    %v250 = vshrl.u32 %v249, 7
    %v251 = vsub.s32 4, %v250
    %v252 = vrot.slane %v231, %v251
    %v253 = vlaneseq
    %v254 = vshrl.u32 %v253, 7
    %v255 = vsub.s32 5, %v254
    %v256 = vrot.slane %v231, %v255
    %v257 = vlaneseq
    %v258 = vshrl.u32 %v257, 7
    %v259 = vsub.s32 6, %v258
    %v260 = vrot.slane %v231, %v259
    %v261 = vlaneseq
    %v262 = vshrl.u32 %v261, 7
    %v263 = vsub.s32 7, %v262
    %v264 = vrot.slane %v231, %v263
    %v273 = vsub.f32 %v149, %v236
    %v274 = vsub.f32 %v152, %v240
    %v275 = vsub.f32 %v155, %v244
    %v276 = vsub.f32 %v158, %v248
    %v277 = vsub.f32 %v161, %v252
    %v278 = vsub.f32 %v164, %v256
    %v279 = vsub.f32 %v167, %v260
    %v280 = vsub.f32 %v170, %v264
    %v281 = vmul.f32 %v273, 1.442695
    %v282 = vpow.pop %v281
    %v283 = vmul.f32 %v274, 1.442695
    %v284 = vpow.pop %v283
    %v285 = vmul.f32 %v275, 1.442695
    %v286 = vpow.pop %v285
    %v287 = vmul.f32 %v276, 1.442695
    %v288 = vpow.pop %v287
    %v289 = vmul.f32 %v277, 1.442695
    %v290 = vpow.pop %v289
    %v291 = vmul.f32 %v278, 1.442695
    %v292 = vpow.pop %v291
    %v293 = vmul.f32 %v279, 1.442695
    %v294 = vpow.pop %v293
    %v295 = vmul.f32 %v280, 1.442695
    %v296 = vpow.pop %v295
    %305 = vset.pattern.permute.xlu0 0
    %306 = vperm.xlu0 %305, %v282
    %v307 = vpop.permute.xlu0 %306
    %308 = vset.pattern.permute.xlu0 0
    %309 = vperm.xlu0 %308, %v284
    %v310 = vpop.permute.xlu0 %309
    %311 = vset.pattern.permute.xlu0 0
    %312 = vperm.xlu0 %311, %v286
    %v313 = vpop.permute.xlu0 %312
    %314 = vset.pattern.permute.xlu0 0
    %315 = vperm.xlu0 %314, %v288
    %v316 = vpop.permute.xlu0 %315
    %317 = vset.pattern.permute.xlu0 0
    %318 = vperm.xlu0 %317, %v290
    %v319 = vpop.permute.xlu0 %318
    %320 = vset.pattern.permute.xlu0 0
    %321 = vperm.xlu0 %320, %v292
    %v322 = vpop.permute.xlu0 %321
    %323 = vset.pattern.permute.xlu0 0
    %324 = vperm.xlu0 %323, %v294
    %v325 = vpop.permute.xlu0 %324
    %326 = vset.pattern.permute.xlu0 0
    %327 = vperm.xlu0 %326, %v296
    %v328 = vpop.permute.xlu0 %327
    %v329 = vlaneseq
    %v330 = vshrl.u32 %v329, 7
    %v331 = vsub.s32 %v180, %v330
    %v332 = vrot.slane %v307, %v331
    %v333 = vlaneseq
    %v334 = vshrl.u32 %v333, 7
    %v335 = vsub.s32 %v180, %v334
    %v336 = vrot.slane %v310, %v335
    %v337 = vlaneseq
    %v338 = vshrl.u32 %v337, 7
    %v339 = vsub.s32 %v180, %v338
    %v340 = vrot.slane %v313, %v339
    %v341 = vlaneseq
    %v342 = vshrl.u32 %v341, 7
    %v343 = vsub.s32 %v180, %v342
    %v344 = vrot.slane %v316, %v343
    %v345 = vlaneseq
    %v346 = vshrl.u32 %v345, 7
    %v347 = vsub.s32 %v180, %v346
    %v348 = vrot.slane %v319, %v347
    %v349 = vlaneseq
    %v350 = vshrl.u32 %v349, 7
    %v351 = vsub.s32 %v180, %v350
    %v352 = vrot.slane %v322, %v351
    %v353 = vlaneseq
    %v354 = vshrl.u32 %v353, 7
    %v355 = vsub.s32 %v180, %v354
    %v356 = vrot.slane %v325, %v355
    %v357 = vlaneseq
    %v358 = vshrl.u32 %v357, 7
    %v359 = vsub.s32 %v180, %v358
    %v360 = vrot.slane %v328, %v359
    %v361 = vsel %vm213, %v336, %v332
    %v362 = vsel %vm215, %v340, %v361
    %v363 = vsel %vm217, %v344, %v362
    %v364 = vsel %vm219, %v348, %v363
    %v365 = vsel %vm221, %v352, %v364
    %v366 = vsel %vm223, %v356, %v365
    %v367 = vsel %vm225, %v360, %v366
    %v369 = vsel %vm228, %v367, 0.0
    %370 = vadd.xlane.f32.xlu0 %v369
    %v371 = vpop.xlane.xlu0 %370
    %v372 = vrcp.pop %v371
    %v374 = vlaneseq
    %v375 = vshrl.u32 %v374, 7
    %v376 = vsub.s32 0, %v375
    %v377 = vrot.slane %v372, %v376
    %v378 = vlaneseq
    %v379 = vshrl.u32 %v378, 7
    %v380 = vsub.s32 1, %v379
    %v381 = vrot.slane %v372, %v380
    %v382 = vlaneseq
    %v383 = vshrl.u32 %v382, 7
    %v384 = vsub.s32 2, %v383
    %v385 = vrot.slane %v372, %v384
    %v386 = vlaneseq
    %v387 = vshrl.u32 %v386, 7
    %v388 = vsub.s32 3, %v387
    %v389 = vrot.slane %v372, %v388
    %v390 = vlaneseq
    %v391 = vshrl.u32 %v390, 7
    %v392 = vsub.s32 4, %v391
    %v393 = vrot.slane %v372, %v392
    %v394 = vlaneseq
    %v395 = vshrl.u32 %v394, 7
    %v396 = vsub.s32 5, %v395
    %v397 = vrot.slane %v372, %v396
    %v398 = vlaneseq
    %v399 = vshrl.u32 %v398, 7
    %v400 = vsub.s32 6, %v399
    %v401 = vrot.slane %v372, %v400
    %v402 = vlaneseq
    %v403 = vshrl.u32 %v402, 7
    %v404 = vsub.s32 7, %v403
    %v405 = vrot.slane %v372, %v404
    %v414 = vmul.f32 %v282, %v377
    %v415 = vmul.f32 %v284, %v381
    %v416 = vmul.f32 %v286, %v385
    %v417 = vmul.f32 %v288, %v389
    %v418 = vmul.f32 %v290, %v393
    %v419 = vmul.f32 %v292, %v397
    %v420 = vmul.f32 %v294, %v401
    %v421 = vmul.f32 %v296, %v405
    %423 = vset.pattern.permute.xlu0 0
    %424 = vperm.xlu0 %423, %v414
    %v425 = vpop.permute.xlu0 %424
    %428 = vset.pattern.permute.xlu0 0
    %429 = vperm.xlu0 %428, %v415
    %v430 = vpop.permute.xlu0 %429
    %433 = vset.pattern.permute.xlu0 0
    %434 = vperm.xlu0 %433, %v416
    %v435 = vpop.permute.xlu0 %434
    %438 = vset.pattern.permute.xlu0 0
    %439 = vperm.xlu0 %438, %v417
    %v440 = vpop.permute.xlu0 %439
    %443 = vset.pattern.permute.xlu0 0
    %444 = vperm.xlu0 %443, %v418
    %v445 = vpop.permute.xlu0 %444
    %448 = vset.pattern.permute.xlu0 0
    %449 = vperm.xlu0 %448, %v419
    %v450 = vpop.permute.xlu0 %449
    %453 = vset.pattern.permute.xlu0 0
    %454 = vperm.xlu0 %453, %v420
    %v455 = vpop.permute.xlu0 %454
    %458 = vset.pattern.permute.xlu0 0
    %459 = vperm.xlu0 %458, %v421
    %v460 = vpop.permute.xlu0 %459
    %v462 = vmul.f32 %v39, %v425
    %v463 = vmul.f32 %v40, %v430
    %v464 = vmul.f32 %v41, %v435
    %v465 = vmul.f32 %v42, %v440
    %v466 = vmul.f32 %v43, %v445
    %v467 = vmul.f32 %v44, %v450
    %v468 = vmul.f32 %v45, %v455
    %v469 = vmul.f32 %v46, %v460
    %v470 = vsel %vm146, %v462, 0.0
    %v471 = vrot.slane %v470, 4
    %v472 = vadd.f32 %v470, %v471
    %v473 = vrot.slane %v472, 2
    %v474 = vadd.f32 %v472, %v473
    %v475 = vrot.slane %v474, 1
    %v476 = vadd.f32 %v474, %v475
    %v477 = vsel %vm146, %v463, 0.0
    %v478 = vrot.slane %v477, 4
    %v479 = vadd.f32 %v477, %v478
    %v480 = vrot.slane %v479, 2
    %v481 = vadd.f32 %v479, %v480
    %v482 = vrot.slane %v481, 1
    %v483 = vadd.f32 %v481, %v482
    %v484 = vsel %vm146, %v464, 0.0
    %v485 = vrot.slane %v484, 4
    %v486 = vadd.f32 %v484, %v485
    %v487 = vrot.slane %v486, 2
    %v488 = vadd.f32 %v486, %v487
    %v489 = vrot.slane %v488, 1
    %v490 = vadd.f32 %v488, %v489
    %v491 = vsel %vm146, %v465, 0.0
    %v492 = vrot.slane %v491, 4
    %v493 = vadd.f32 %v491, %v492
    %v494 = vrot.slane %v493, 2
    %v495 = vadd.f32 %v493, %v494
    %v496 = vrot.slane %v495, 1
    %v497 = vadd.f32 %v495, %v496
    %v498 = vsel %vm146, %v466, 0.0
    %v499 = vrot.slane %v498, 4
    %v500 = vadd.f32 %v498, %v499
    %v501 = vrot.slane %v500, 2
    %v502 = vadd.f32 %v500, %v501
    %v503 = vrot.slane %v502, 1
    %v504 = vadd.f32 %v502, %v503
    %v505 = vsel %vm146, %v467, 0.0
    %v506 = vrot.slane %v505, 4
    %v507 = vadd.f32 %v505, %v506
    %v508 = vrot.slane %v507, 2
    %v509 = vadd.f32 %v507, %v508
    %v510 = vrot.slane %v509, 1
    %v511 = vadd.f32 %v509, %v510
    %v512 = vsel %vm146, %v468, 0.0
    %v513 = vrot.slane %v512, 4
    %v514 = vadd.f32 %v512, %v513
    %v515 = vrot.slane %v514, 2
    %v516 = vadd.f32 %v514, %v515
    %v517 = vrot.slane %v516, 1
    %v518 = vadd.f32 %v516, %v517
    %v519 = vsel %vm146, %v469, 0.0
    %v520 = vrot.slane %v519, 4
    %v521 = vadd.f32 %v519, %v520
    %v522 = vrot.slane %v521, 2
    %v523 = vadd.f32 %v521, %v522
    %v524 = vrot.slane %v523, 1
    %v525 = vadd.f32 %v523, %v524
    %v534 = vsel %vm213, %v483, %v476
    %v535 = vsel %vm215, %v490, %v534
    %v536 = vsel %vm217, %v497, %v535
    %v537 = vsel %vm219, %v504, %v536
    %v538 = vsel %vm221, %v511, %v537
    %v539 = vsel %vm223, %v518, %v538
    %v540 = vsel %vm225, %v525, %v539
    %542 = vrot.lane.b32.xlu0 %v47, 32
    %v543 = vpop.permute.xlu0 %542
    %v545 = vsel %vm146, %v540, %v543
    %v546 = vpack.c.bf16 %v545, %v545
    %v547 = vld [vmem:[%s2] sm:$0xf]
    %v548 = vld [vmem:[%s2 + $0x4] sm:$0xf]
    %v549 = vld [vmem:[%s2 + $0x8] sm:$0xf]
    %v550 = vld [vmem:[%s2 + $0xc] sm:$0xf]
    %v551 = vld [vmem:[%s2 + $0x10] sm:$0xf]
    %v552 = vld [vmem:[%s2 + $0x14] sm:$0xf]
    %v553 = vld [vmem:[%s2 + $0x18] sm:$0xf]
    %v554 = vld [vmem:[%s2 + $0x1c] sm:$0xf]
    %v555 = vld [vmem:[%s3] sm:$0x1]
    %v557 = vlaneseq
    %v558 = vshrl.u32 %v557, 7
    %v559 = vsub.s32 0, %v558
    %v560 = vrot.slane %v555, %v559
    %v570 = vunpack.c.l.b16 %v547
    %v571 = vunpack.c.l.b16 %v548
    %v572 = vunpack.c.l.b16 %v549
    %v573 = vunpack.c.l.b16 %v550
    %v574 = vunpack.c.l.b16 %v551
    %v575 = vunpack.c.l.b16 %v552
    %v576 = vunpack.c.l.b16 %v553
    %v577 = vunpack.c.l.b16 %v554
    %v578 = vpack.c.b16 %v571, %v570
    %v579 = vpack.c.b16 %v573, %v572
    %v580 = vpack.c.b16 %v575, %v574
    %v581 = vpack.c.b16 %v577, %v576
    %vm586 = vcmask 523264
    %v588 = vsel %vm586, %v546, 0
    %590 = vmatprep.subr.bf16.mxu0 0
    %591 = vmatpush1.bf16.msra.mxu0 %v578
    %592 = vmatprep.subr.bf16.mxu0 0
    %593 = vmatpush1.bf16.msra.mxu0 %v579
    %594 = vmatprep.subr.bf16.mxu0 0
    %595 = vmatpush1.bf16.msra.mxu0 %v580
    %596 = vmatprep.subr.bf16.mxu0 0
    %597 = vmatpush1.bf16.msra.mxu0 %v581
    %598 = vmatprep.subr.bf16.mxu0 0
    %599 = vmatpush1.bf16.msra.mxu0 0
    %600 = vmatprep.subr.bf16.mxu0 0
    %601 = vmatpush1.bf16.msra.mxu0 0
    %602 = vmatprep.subr.bf16.mxu0 0
    %603 = vmatpush1.bf16.msra.mxu0 0
    %604 = vmatprep.subr.bf16.mxu0 0
    %605 = vmatpush1.bf16.msra.mxu0 0
    %606 = vmatprep.subr.bf16.mxu0 0
    %607 = vmatpush1.bf16.msra.mxu0 0
    %608 = vmatprep.subr.bf16.mxu0 0
    %609 = vmatpush1.bf16.msra.mxu0 0
    %610 = vmatprep.subr.bf16.mxu0 0
    %611 = vmatpush1.bf16.msra.mxu0 0
    %612 = vmatprep.subr.bf16.mxu0 0
    %613 = vmatpush1.bf16.msra.mxu0 0
    %614 = vmatprep.subr.bf16.mxu0 0
    %615 = vmatpush1.bf16.msra.mxu0 0
    %616 = vmatprep.subr.bf16.mxu0 0
    %617 = vmatpush1.bf16.msra.mxu0 0
    %618 = vmatprep.subr.bf16.mxu0 0
    %619 = vmatpush1.bf16.msra.mxu0 0
    %620 = vmatprep.subr.bf16.mxu0 0
    %621 = vmatpush1.bf16.msra.mxu0 0
    %622 = vmatprep.mubr.bf16.mxu0 0
    %623 = vmatmul.mubr.bf16.gmra.mrb[0].mxu0 %v588
    %v624 = vpop.f32.mrb[0].mxu0
    %v625 = vadd.f32 %v560, %v624
    %v626 = vpop.f32.mrb[0].mxu0
    %v627 = vpop.f32.mrb[0].mxu0
    %v628 = vpop.f32.mrb[0].mxu0
    %629 = vdwg.mxu0
    %v630 = vtanh.pop %v625
    %v631 = vpack.c.bf16 %v630, %v630
    %v632 = vld [vmem:[%s4] sm:$0xf]
    %v633 = vld [vmem:[%s4 + $0x4] sm:$0xf]
    %v634 = vld [vmem:[%s4 + $0x8] sm:$0xf]
    %v635 = vld [vmem:[%s4 + $0xc] sm:$0xf]
    %v636 = vld [vmem:[%s5] sm:$0x1]
    %v638 = vlaneseq
    %v639 = vshrl.u32 %v638, 7
    %v640 = vsub.s32 0, %v639
    %v641 = vrot.slane %v636, %v640
    %v647 = vunpack.c.l.b16 %v632
    %v648 = vunpack.c.l.b16 %v633
    %v649 = vunpack.c.l.b16 %v634
    %v650 = vunpack.c.l.b16 %v635
    %v651 = vpack.c.b16 %v648, %v647
    %v652 = vpack.c.b16 %v650, %v649
    %v656 = vsel %vm146, %v631, 0
    %658 = vmatprep.subr.bf16.mxu0 0
    %659 = vmatpush1.bf16.msra.mxu0 %v651
    %660 = vmatprep.subr.bf16.mxu0 0
    %661 = vmatpush1.bf16.msra.mxu0 %v652
    %662 = vmatprep.subr.bf16.mxu0 0
    %663 = vmatpush1.bf16.msra.mxu0 0
    %664 = vmatprep.subr.bf16.mxu0 0
    %665 = vmatpush1.bf16.msra.mxu0 0
    %666 = vmatprep.subr.bf16.mxu0 0
    %667 = vmatpush1.bf16.msra.mxu0 0
    %668 = vmatprep.subr.bf16.mxu0 0
    %669 = vmatpush1.bf16.msra.mxu0 0
    %670 = vmatprep.subr.bf16.mxu0 0
    %671 = vmatpush1.bf16.msra.mxu0 0
    %672 = vmatprep.subr.bf16.mxu0 0
    %673 = vmatpush1.bf16.msra.mxu0 0
    %674 = vmatprep.subr.bf16.mxu0 0
    %675 = vmatpush1.bf16.msra.mxu0 0
    %676 = vmatprep.subr.bf16.mxu0 0
    %677 = vmatpush1.bf16.msra.mxu0 0
    %678 = vmatprep.subr.bf16.mxu0 0
    %679 = vmatpush1.bf16.msra.mxu0 0
    %680 = vmatprep.subr.bf16.mxu0 0
    %681 = vmatpush1.bf16.msra.mxu0 0
    %682 = vmatprep.subr.bf16.mxu0 0
    %683 = vmatpush1.bf16.msra.mxu0 0
    %684 = vmatprep.subr.bf16.mxu0 0
    %685 = vmatpush1.bf16.msra.mxu0 0
    %686 = vmatprep.subr.bf16.mxu0 0
    %687 = vmatpush1.bf16.msra.mxu0 0
    %688 = vmatprep.subr.bf16.mxu0 0
    %689 = vmatpush1.bf16.msra.mxu0 0
    %690 = vmatprep.mubr.bf16.mxu0 0
    %691 = vmatmul.mubr.bf16.gmra.mrb[0].mxu0 %v656
    %v692 = vpop.f32.mrb[0].mxu0
    %v693 = vadd.f32 %v641, %v692
    %v694 = vpop.f32.mrb[0].mxu0
    %v695 = vpop.f32.mrb[0].mxu0
    %v696 = vpop.f32.mrb[0].mxu0
    %697 = vdwg.mxu0
    %698 = vmax.xlane.f32.xlu0 %v693
    %v699 = vpop.xlane.xlu0 %698
    %v700 = vsub.f32 %v693, %v699
    %v701 = vmul.f32 %v700, 1.442695
    %v702 = vpow.pop %v701
    %703 = vadd.xlane.f32.xlu0 %v702
    %v704 = vpop.xlane.xlu0 %703
    %v705 = vlog2.pop %v704
    %v706 = vmul.f32 %v705, 0.6931472
    %v707 = vsub.f32 %v700, %v706
    %708 = vst [vmem:[#allocation5] sm:$0xff] %v707
    // Predicated region
    $region30: #{tpu_custom_call.1} parent=1 // pred_check
      _
    $region31: #{tpu_custom_call.1} parent=1 // pred_check_branch
      %710 = sbr.rel (0) target = $region33
    $region32: #{tpu_custom_call.1} parent=1 // pred_region
      %s712 = ssub.s32 128, 128
      %713 = vsyncadd [#allocation4], %s712
      %s715 = sshll.u32 [#allocation5], 4
      %s716 = int_to_ptr.vmem [resolvable:$true] %s715
      %718 = dma.vmem_to_hbm [thread:$0]  %s716, 128, %s6, [#allocation4]
    $region33: #{tpu_custom_call.1} parent=1 // pred_fallthru
      _
    // Predicated region
    $region34: #{tpu_custom_call.1} parent=1 // pred_check
      _
    $region35: #{tpu_custom_call.1} parent=1 // pred_check_branch
      %720 = sbr.rel (0) target = $region37
    $region36: #{tpu_custom_call.1} parent=1 // pred_region
      %721 = dma.done [#allocation4], 128
    $region37: #{tpu_custom_call.1} parent=1 // pred_fallthru
      _
    %722 = vsyncpa [#allocation3], 1
    %723 = vsyncpa [#allocation4], 1

// kernel: tpu_custom_call.1
$region0: #{tpu_custom_call.1}
  #allocation0 [shape = 'u32[]', space=smem, size = 0x4, offset = 0x4, fixed_abs, tag = 'smem constant byte address 0x4 - core index']
  #allocation1 [shape = 'u32[144,128]{1,0:T(1,128)}', space=vmem, size = 0x12000, scoped, tag = 'internal scratch']
  %s0 = inlined_call_operand.hbm [shape: f32[8,8,32], index: 0, kind: input, shape index: {}]
  %s1 = inlined_call_operand.vmem [shape: f32[8,32], index: 1, kind: input, shape index: {}]
  %s2 = inlined_call_operand.vmem [shape: bf16[64,32], index: 2, kind: input, shape index: {}]
  %s3 = inlined_call_operand.vmem [shape: f32[1,32], index: 3, kind: input, shape index: {}]
  %s4 = inlined_call_operand.vmem [shape: bf16[32,128], index: 4, kind: input, shape index: {}]
  %s5 = inlined_call_operand.vmem [shape: f32[1,128], index: 5, kind: input, shape index: {}]
  %s6 = inlined_call_operand.hbm [shape: f32[8,128], index: 6, kind: output, shape index: {}]
  %s7 = sld [smem:[#allocation0]]
  $region38: #{tpu_custom_call.1} parent=0
    _
  %s9 = ssub.s32 1, %s7
  %s10 = scalar_select 0, %s9, %s7
  $region1: #{tpu_custom_call.1} parent=0
    #allocation2 [shape = 'u8[32768]{0}', space=vmem, size = 0x8000, scoped, tag = 'input window, operand 0, single buffered']
    #allocation3 [shape = 's32[1]{0}', space=sflag, size = 0x4, scoped, tag = 'scoped memory for tpu_custom_call.1']
    #allocation4 [shape = 's32[1]{0}', space=sflag, size = 0x4, scoped, tag = 'scoped memory for tpu_custom_call.1']
    #allocation5 [shape = 'u8[4096]{0}', space=vmem, size = 0x1000, scoped, tag = 'output window, operand 0, single buffered']
    %11 = vsyncpa [#allocation3], 0
    %12 = vsyncpa [#allocation4], 0
    // Predicated region
    $region2: #{tpu_custom_call.1} parent=1 // pred_check
      _
    $region3: #{tpu_custom_call.1} parent=1 // pred_check_branch
      %14 = sbr.rel (0) target = $region5
    $region4: #{tpu_custom_call.1} parent=1 // pred_region
      %s16 = ssub.s32 1024, 1024
      %17 = vsyncadd [#allocation3], %s16
      %s18 = sshll.u32 [#allocation2], 4
      %s19 = int_to_ptr.vmem [resolvable:$true] %s18
      %24 = dma.hbm_to_vmem [thread:$0]  %s0, 1024, %s19, [#allocation3], 128, 128, 8
    $region5: #{tpu_custom_call.1} parent=1 // pred_fallthru
      _
    // Predicated region
    $region6: #{tpu_custom_call.1} parent=1 // pred_check
      _
    $region7: #{tpu_custom_call.1} parent=1 // pred_check_branch
      %26 = sbr.rel (0) target = $region9
    $region8: #{tpu_custom_call.1} parent=1 // pred_region
      _
    $region9: #{tpu_custom_call.1} parent=1 // pred_fallthru
      _
    // Predicated region
    $region10: #{tpu_custom_call.1} parent=1 // pred_check
      _
    $region11: #{tpu_custom_call.1} parent=1 // pred_check_branch
      %28 = sbr.rel (0) target = $region13
    $region12: #{tpu_custom_call.1} parent=1 // pred_region
      _
    $region13: #{tpu_custom_call.1} parent=1 // pred_fallthru
      _
    // Predicated region
    $region14: #{tpu_custom_call.1} parent=1 // pred_check
      _
    $region15: #{tpu_custom_call.1} parent=1 // pred_check_branch
      %30 = sbr.rel (0) target = $region17
    $region16: #{tpu_custom_call.1} parent=1 // pred_region
      _
    $region17: #{tpu_custom_call.1} parent=1 // pred_fallthru
      _
    // Predicated region
    $region18: #{tpu_custom_call.1} parent=1 // pred_check
      _
    $region19: #{tpu_custom_call.1} parent=1 // pred_check_branch
      %32 = sbr.rel (0) target = $region21
    $region20: #{tpu_custom_call.1} parent=1 // pred_region
      _
    $region21: #{tpu_custom_call.1} parent=1 // pred_fallthru
      _
    // Predicated region
    $region22: #{tpu_custom_call.1} parent=1 // pred_check
      _
    $region23: #{tpu_custom_call.1} parent=1 // pred_check_branch
      %34 = sbr.rel (0) target = $region25
    $region24: #{tpu_custom_call.1} parent=1 // pred_region
      _
    $region25: #{tpu_custom_call.1} parent=1 // pred_fallthru
      _
    // Predicated region
    $region26: #{tpu_custom_call.1} parent=1 // pred_check
      _
    $region27: #{tpu_custom_call.1} parent=1 // pred_check_branch
      %36 = sbr.rel (0) target = $region29
    $region28: #{tpu_custom_call.1} parent=1 // pred_region
      %37 = dma.done [#allocation3], 1024
    $region29: #{tpu_custom_call.1} parent=1 // pred_fallthru
      _
    %v39 = vld [vmem:[#allocation2] sm:$0xff]
    %v40 = vld [vmem:[#allocation2 + $0x8] sm:$0xff]
    %v41 = vld [vmem:[#allocation2 + $0x10] sm:$0xff]
    %v42 = vld [vmem:[#allocation2 + $0x18] sm:$0xff]
    %v43 = vld [vmem:[#allocation2 + $0x20] sm:$0xff]
    %v44 = vld [vmem:[#allocation2 + $0x28] sm:$0xff]
    %v45 = vld [vmem:[#allocation2 + $0x30] sm:$0xff]
    %v46 = vld [vmem:[#allocation2 + $0x38] sm:$0xff]
    %v47 = vld [vmem:[%s1] sm:$0xff]
    %v49 = vcombine.high %v47, %v47
    %v51 = vunpack.c.l.s4 1966171168
    %v52 = vunpack.c.0.s8 %v51
    %v53 = vlaneseq
    %v54 = vshrl.u32 %v53, 7
    %v55 = vsub.s32 %v52, %v54
    %v56 = vrot.slane %v47, %v55
    %v58 = vunpack.c.l.s4 1966171168
    %v59 = vunpack.c.0.s8 %v58
    %v60 = vlaneseq
    %v61 = vshrl.u32 %v60, 7
    %v62 = vsub.s32 %v59, %v61
    %v63 = vrot.slane %v49, %v62
    %v64 = vcombine.high %v56, %v56
    %v65 = vcombine.high %v63, %v63
    %v67 = vunpack.c.l.s4 1966171168
    %v68 = vunpack.c.0.s8 %v67
    %v69 = vlaneseq
    %v70 = vshrl.u32 %v69, 7
    %v71 = vsub.s32 %v68, %v70
    %v72 = vrot.slane %v56, %v71
    %v74 = vunpack.c.l.s4 1966171168
    %v75 = vunpack.c.0.s8 %v74
    %v76 = vlaneseq
    %v77 = vshrl.u32 %v76, 7
    %v78 = vsub.s32 %v75, %v77
    %v79 = vrot.slane %v63, %v78
    %v81 = vunpack.c.l.s4 1966171168
    %v82 = vunpack.c.0.s8 %v81
    %v83 = vlaneseq
    %v84 = vshrl.u32 %v83, 7
    %v85 = vsub.s32 %v82, %v84
    %v86 = vrot.slane %v64, %v85
    %v88 = vunpack.c.l.s4 1966171168
    %v89 = vunpack.c.0.s8 %v88
    %v90 = vlaneseq
    %v91 = vshrl.u32 %v90, 7
    %v92 = vsub.s32 %v89, %v91
    %v93 = vrot.slane %v65, %v92
    %v94 = vcombine.high %v72, %v72
    %v95 = vcombine.high %v79, %v79
    %v96 = vcombine.high %v86, %v86
    %v97 = vcombine.high %v93, %v93
    %v98 = vlaneseq
    %v99 = vshrl.u32 %v98, 7
    %v100 = vsub.s32 0, %v99
    %v101 = vrot.slane %v72, %v100
    %v102 = vlaneseq
    %v103 = vshrl.u32 %v102, 7
    %v104 = vsub.s32 0, %v103
    %v105 = vrot.slane %v86, %v104
    %v106 = vlaneseq
    %v107 = vshrl.u32 %v106, 7
    %v108 = vsub.s32 0, %v107
    %v109 = vrot.slane %v94, %v108
    %v110 = vlaneseq
    %v111 = vshrl.u32 %v110, 7
    %v112 = vsub.s32 0, %v111
    %v113 = vrot.slane %v96, %v112
    %v114 = vlaneseq
    %v115 = vshrl.u32 %v114, 7
    %v116 = vsub.s32 0, %v115
    %v117 = vrot.slane %v79, %v116
    %v118 = vlaneseq
    %v119 = vshrl.u32 %v118, 7
    %v120 = vsub.s32 0, %v119
    %v121 = vrot.slane %v93, %v120
    %v122 = vlaneseq
    %v123 = vshrl.u32 %v122, 7
    %v124 = vsub.s32 0, %v123
    %v125 = vrot.slane %v95, %v124
    %v126 = vlaneseq
    %v127 = vshrl.u32 %v126, 7
    %v128 = vsub.s32 0, %v127
    %v129 = vrot.slane %v97, %v128
    %v138 = vmul.f32 %v39, %v101
    %v139 = vmul.f32 %v40, %v105
    %v140 = vmul.f32 %v41, %v109
    %v141 = vmul.f32 %v42, %v113
    %v142 = vmul.f32 %v43, %v117
    %v143 = vmul.f32 %v44, %v121
    %v144 = vmul.f32 %v45, %v125
    %v145 = vmul.f32 %v46, %v129
    %vm146 = vcmask 261120
    %v147 = vsel %vm146, %v138, 0.0
    %148 = vadd.xlane.f32.xlu0 %v147
    %v149 = vpop.xlane.xlu0 %148
    %v150 = vsel %vm146, %v139, 0.0
    %151 = vadd.xlane.f32.xlu0 %v150
    %v152 = vpop.xlane.xlu0 %151
    %v153 = vsel %vm146, %v140, 0.0
    %154 = vadd.xlane.f32.xlu0 %v153
    %v155 = vpop.xlane.xlu0 %154
    %v156 = vsel %vm146, %v141, 0.0
    %157 = vadd.xlane.f32.xlu0 %v156
    %v158 = vpop.xlane.xlu0 %157
    %v159 = vsel %vm146, %v142, 0.0
    %160 = vadd.xlane.f32.xlu0 %v159
    %v161 = vpop.xlane.xlu0 %160
    %v162 = vsel %vm146, %v143, 0.0
    %163 = vadd.xlane.f32.xlu0 %v162
    %v164 = vpop.xlane.xlu0 %163
    %v165 = vsel %vm146, %v144, 0.0
    %166 = vadd.xlane.f32.xlu0 %v165
    %v167 = vpop.xlane.xlu0 %166
    %v168 = vsel %vm146, %v145, 0.0
    %169 = vadd.xlane.f32.xlu0 %v168
    %v170 = vpop.xlane.xlu0 %169
    %v179 = vlaneseq
    %v180 = vand.u32 %v179, 127
    %v181 = vlaneseq
    %v182 = vshrl.u32 %v181, 7
    %v183 = vsub.s32 %v180, %v182
    %v184 = vrot.slane %v149, %v183
    %v185 = vlaneseq
    %v186 = vshrl.u32 %v185, 7
    %v187 = vsub.s32 %v180, %v186
    %v188 = vrot.slane %v152, %v187
    %v189 = vlaneseq
    %v190 = vshrl.u32 %v189, 7
    %v191 = vsub.s32 %v180, %v190
    %v192 = vrot.slane %v155, %v191
    %v193 = vlaneseq
    %v194 = vshrl.u32 %v193, 7
    %v195 = vsub.s32 %v180, %v194
    %v196 = vrot.slane %v158, %v195
    %v197 = vlaneseq
    %v198 = vshrl.u32 %v197, 7
    %v199 = vsub.s32 %v180, %v198
    %v200 = vrot.slane %v161, %v199
    %v201 = vlaneseq
    %v202 = vshrl.u32 %v201, 7
    %v203 = vsub.s32 %v180, %v202
    %v204 = vrot.slane %v164, %v203
    %v205 = vlaneseq
    %v206 = vshrl.u32 %v205, 7
    %v207 = vsub.s32 %v180, %v206
    %v208 = vrot.slane %v167, %v207
    %v209 = vlaneseq
    %v210 = vshrl.u32 %v209, 7
    %v211 = vsub.s32 %v180, %v210
    %v212 = vrot.slane %v170, %v211
    %vm213 = vcmask 1041409
    %v214 = vsel %vm213, %v188, %v184
    %vm215 = vcmask 1042434
    %v216 = vsel %vm215, %v192, %v214
    %vm217 = vcmask 1043459
    %v218 = vsel %vm217, %v196, %v216
    %vm219 = vcmask 1044484
    %v220 = vsel %vm219, %v200, %v218
    %vm221 = vcmask 1045509
    %v222 = vsel %vm221, %v204, %v220
    %vm223 = vcmask 1046534
    %v224 = vsel %vm223, %v208, %v222
    %vm225 = vcmask 1047559
    %v226 = vsel %vm225, %v212, %v224
    %vm228 = vcmask 64512
    %v229 = vsel %vm228, %v226, -inf
    %230 = vmax.xlane.f32.xlu0 %v229
    %v231 = vpop.xlane.xlu0 %230
    %v233 = vlaneseq
    %v234 = vshrl.u32 %v233, 7
    %v235 = vsub.s32 0, %v234
    %v236 = vrot.slane %v231, %v235
    %v237 = vlaneseq
    %v238 = vshrl.u32 %v237, 7
    %v239 = vsub.s32 1, %v238
    %v240 = vrot.slane %v231, %v239
    %v241 = vlaneseq
    %v242 = vshrl.u32 %v241, 7
    %v243 = vsub.s32 2, %v242
    %v244 = vrot.slane %v231, %v243
    %v245 = vlaneseq
    %v246 = vshrl.u32 %v245, 7
    %v247 = vsub.s32 3, %v246
    %v248 = vrot.slane %v231, %v247
    %v249 = vlaneseq
    %v250 = vshrl.u32 %v249, 7
    %v251 = vsub.s32 4, %v250
    %v252 = vrot.slane %v231, %v251
    %v253 = vlaneseq
    %v254 = vshrl.u32 %v253, 7
    %v255 = vsub.s32 5, %v254
    %v256 = vrot.slane %v231, %v255
    %v257 = vlaneseq
    %v258 = vshrl.u32 %v257, 7
    %v259 = vsub.s32 6, %v258
    %v260 = vrot.slane %v231, %v259
    %v261 = vlaneseq
    %v262 = vshrl.u32 %v261, 7
    %v263 = vsub.s32 7, %v262
    %v264 = vrot.slane %v231, %v263
    %v273 = vsub.f32 %v149, %v236
    %v274 = vsub.f32 %v152, %v240
    %v275 = vsub.f32 %v155, %v244
    %v276 = vsub.f32 %v158, %v248
    %v277 = vsub.f32 %v161, %v252
    %v278 = vsub.f32 %v164, %v256
    %v279 = vsub.f32 %v167, %v260
    %v280 = vsub.f32 %v170, %v264
    %v281 = vmul.f32 %v273, 1.442695
    %v282 = vpow.pop %v281
    %v283 = vmul.f32 %v274, 1.442695
    %v284 = vpow.pop %v283
    %v285 = vmul.f32 %v275, 1.442695
    %v286 = vpow.pop %v285
    %v287 = vmul.f32 %v276, 1.442695
    %v288 = vpow.pop %v287
    %v289 = vmul.f32 %v277, 1.442695
    %v290 = vpow.pop %v289
    %v291 = vmul.f32 %v278, 1.442695
    %v292 = vpow.pop %v291
    %v293 = vmul.f32 %v279, 1.442695
    %v294 = vpow.pop %v293
    %v295 = vmul.f32 %v280, 1.442695
    %v296 = vpow.pop %v295
    %305 = vset.pattern.permute.xlu0 0
    %306 = vperm.xlu0 %305, %v282
    %v307 = vpop.permute.xlu0 %306
    %308 = vset.pattern.permute.xlu0 0
    %309 = vperm.xlu0 %308, %v284
    %v310 = vpop.permute.xlu0 %309
    %311 = vset.pattern.permute.xlu0 0
    %312 = vperm.xlu0 %311, %v286
    %v313 = vpop.permute.xlu0 %312
    %314 = vset.pattern.permute.xlu0 0
    %315 = vperm.xlu0 %314, %v288
    %v316 = vpop.permute.xlu0 %315
    %317 = vset.pattern.permute.xlu0 0
    %318 = vperm.xlu0 %317, %v290
    %v319 = vpop.permute.xlu0 %318
    %320 = vset.pattern.permute.xlu0 0
    %321 = vperm.xlu0 %320, %v292
    %v322 = vpop.permute.xlu0 %321
    %323 = vset.pattern.permute.xlu0 0
    %324 = vperm.xlu0 %323, %v294
    %v325 = vpop.permute.xlu0 %324
    %326 = vset.pattern.permute.xlu0 0
    %327 = vperm.xlu0 %326, %v296
    %v328 = vpop.permute.xlu0 %327
    %v329 = vlaneseq
    %v330 = vshrl.u32 %v329, 7
    %v331 = vsub.s32 %v180, %v330
    %v332 = vrot.slane %v307, %v331
    %v333 = vlaneseq
    %v334 = vshrl.u32 %v333, 7
    %v335 = vsub.s32 %v180, %v334
    %v336 = vrot.slane %v310, %v335
    %v337 = vlaneseq
    %v338 = vshrl.u32 %v337, 7
    %v339 = vsub.s32 %v180, %v338
    %v340 = vrot.slane %v313, %v339
    %v341 = vlaneseq
    %v342 = vshrl.u32 %v341, 7
    %v343 = vsub.s32 %v180, %v342
    %v344 = vrot.slane %v316, %v343
    %v345 = vlaneseq
    %v346 = vshrl.u32 %v345, 7
    %v347 = vsub.s32 %v180, %v346
    %v348 = vrot.slane %v319, %v347
    %v349 = vlaneseq
    %v350 = vshrl.u32 %v349, 7
    %v351 = vsub.s32 %v180, %v350
    %v352 = vrot.slane %v322, %v351
    %v353 = vlaneseq
    %v354 = vshrl.u32 %v353, 7
    %v355 = vsub.s32 %v180, %v354
    %v356 = vrot.slane %v325, %v355
    %v357 = vlaneseq
    %v358 = vshrl.u32 %v357, 7
    %v359 = vsub.s32 %v180, %v358
    %v360 = vrot.slane %v328, %v359
    %v361 = vsel %vm213, %v336, %v332
    %v362 = vsel %vm215, %v340, %v361
    %v363 = vsel %vm217, %v344, %v362
    %v364 = vsel %vm219, %v348, %v363
    %v365 = vsel %vm221, %v352, %v364
    %v366 = vsel %vm223, %v356, %v365
    %v367 = vsel %vm225, %v360, %v366
    %v369 = vsel %vm228, %v367, 0.0
    %370 = vadd.xlane.f32.xlu0 %v369
    %v371 = vpop.xlane.xlu0 %370
    %v372 = vrcp.pop %v371
    %v374 = vlaneseq
    %v375 = vshrl.u32 %v374, 7
    %v376 = vsub.s32 0, %v375
    %v377 = vrot.slane %v372, %v376
    %v378 = vlaneseq
    %v379 = vshrl.u32 %v378, 7
    %v380 = vsub.s32 1, %v379
    %v381 = vrot.slane %v372, %v380
    %v382 = vlaneseq
    %v383 = vshrl.u32 %v382, 7
    %v384 = vsub.s32 2, %v383
    %v385 = vrot.slane %v372, %v384
    %v386 = vlaneseq
    %v387 = vshrl.u32 %v386, 7
    %v388 = vsub.s32 3, %v387
    %v389 = vrot.slane %v372, %v388
    %v390 = vlaneseq
    %v391 = vshrl.u32 %v390, 7
    %v392 = vsub.s32 4, %v391
    %v393 = vrot.slane %v372, %v392
    %v394 = vlaneseq
    %v395 = vshrl.u32 %v394, 7
    %v396 = vsub.s32 5, %v395
    %v397 = vrot.slane %v372, %v396
    %v398 = vlaneseq
    %v399 = vshrl.u32 %v398, 7
    %v400 = vsub.s32 6, %v399
    %v401 = vrot.slane %v372, %v400
    %v402 = vlaneseq
    %v403 = vshrl.u32 %v402, 7
    %v404 = vsub.s32 7, %v403
    %v405 = vrot.slane %v372, %v404
    %v414 = vmul.f32 %v282, %v377
    %v415 = vmul.f32 %v284, %v381
    %v416 = vmul.f32 %v286, %v385
    %v417 = vmul.f32 %v288, %v389
    %v418 = vmul.f32 %v290, %v393
    %v419 = vmul.f32 %v292, %v397
    %v420 = vmul.f32 %v294, %v401
    %v421 = vmul.f32 %v296, %v405
    %423 = vset.pattern.permute.xlu0 0
    %424 = vperm.xlu0 %423, %v414
    %v425 = vpop.permute.xlu0 %424
    %428 = vset.pattern.permute.xlu0 0
    %429 = vperm.xlu0 %428, %v415
    %v430 = vpop.permute.xlu0 %429
    %433 = vset.pattern.permute.xlu0 0
    %434 = vperm.xlu0 %433, %v416
    %v435 = vpop.permute.xlu0 %434
    %438 = vset.pattern.permute.xlu0 0
    %439 = vperm.xlu0 %438, %v417
    %v440 = vpop.permute.xlu0 %439
    %443 = vset.pattern.permute.xlu0 0
    %444 = vperm.xlu0 %443, %v418
    %v445 = vpop.permute.xlu0 %444
    %448 = vset.pattern.permute.xlu0 0
    %449 = vperm.xlu0 %448, %v419
    %v450 = vpop.permute.xlu0 %449
    %453 = vset.pattern.permute.xlu0 0
    %454 = vperm.xlu0 %453, %v420
    %v455 = vpop.permute.xlu0 %454
    %458 = vset.pattern.permute.xlu0 0
    %459 = vperm.xlu0 %458, %v421
    %v460 = vpop.permute.xlu0 %459
    %v462 = vmul.f32 %v39, %v425
    %v463 = vmul.f32 %v40, %v430
    %v464 = vmul.f32 %v41, %v435
    %v465 = vmul.f32 %v42, %v440
    %v466 = vmul.f32 %v43, %v445
    %v467 = vmul.f32 %v44, %v450
    %v468 = vmul.f32 %v45, %v455
    %v469 = vmul.f32 %v46, %v460
    %v470 = vsel %vm146, %v462, 0.0
    %v471 = vrot.slane %v470, 4
    %v472 = vadd.f32 %v470, %v471
    %v473 = vrot.slane %v472, 2
    %v474 = vadd.f32 %v472, %v473
    %v475 = vrot.slane %v474, 1
    %v476 = vadd.f32 %v474, %v475
    %v477 = vsel %vm146, %v463, 0.0
    %v478 = vrot.slane %v477, 4
    %v479 = vadd.f32 %v477, %v478
    %v480 = vrot.slane %v479, 2
    %v481 = vadd.f32 %v479, %v480
    %v482 = vrot.slane %v481, 1
    %v483 = vadd.f32 %v481, %v482
    %v484 = vsel %vm146, %v464, 0.0
    %v485 = vrot.slane %v484, 4
    %v486 = vadd.f32 %v484, %v485
    %v487 = vrot.slane %v486, 2
    %v488 = vadd.f32 %v486, %v487
    %v489 = vrot.slane %v488, 1
    %v490 = vadd.f32 %v488, %v489
    %v491 = vsel %vm146, %v465, 0.0
    %v492 = vrot.slane %v491, 4
    %v493 = vadd.f32 %v491, %v492
    %v494 = vrot.slane %v493, 2
    %v495 = vadd.f32 %v493, %v494
    %v496 = vrot.slane %v495, 1
    %v497 = vadd.f32 %v495, %v496
    %v498 = vsel %vm146, %v466, 0.0
    %v499 = vrot.slane %v498, 4
    %v500 = vadd.f32 %v498, %v499
    %v501 = vrot.slane %v500, 2
    %v502 = vadd.f32 %v500, %v501
    %v503 = vrot.slane %v502, 1
    %v504 = vadd.f32 %v502, %v503
    %v505 = vsel %vm146, %v467, 0.0
    %v506 = vrot.slane %v505, 4
    %v507 = vadd.f32 %v505, %v506
    %v508 = vrot.slane %v507, 2
    %v509 = vadd.f32 %v507, %v508
    %v510 = vrot.slane %v509, 1
    %v511 = vadd.f32 %v509, %v510
    %v512 = vsel %vm146, %v468, 0.0
    %v513 = vrot.slane %v512, 4
    %v514 = vadd.f32 %v512, %v513
    %v515 = vrot.slane %v514, 2
    %v516 = vadd.f32 %v514, %v515
    %v517 = vrot.slane %v516, 1
    %v518 = vadd.f32 %v516, %v517
    %v519 = vsel %vm146, %v469, 0.0
    %v520 = vrot.slane %v519, 4
    %v521 = vadd.f32 %v519, %v520
    %v522 = vrot.slane %v521, 2
    %v523 = vadd.f32 %v521, %v522
    %v524 = vrot.slane %v523, 1
    %v525 = vadd.f32 %v523, %v524
    %v534 = vsel %vm213, %v483, %v476
    %v535 = vsel %vm215, %v490, %v534
    %v536 = vsel %vm217, %v497, %v535
    %v537 = vsel %vm219, %v504, %v536
    %v538 = vsel %vm221, %v511, %v537
    %v539 = vsel %vm223, %v518, %v538
    %v540 = vsel %vm225, %v525, %v539
    %542 = vrot.lane.b32.xlu0 %v47, 32
    %v543 = vpop.permute.xlu0 %542
    %v545 = vsel %vm146, %v540, %v543
    %v546 = vpack.c.bf16 %v545, %v545
    %v547 = vld [vmem:[%s2] sm:$0xf]
    %v548 = vld [vmem:[%s2 + $0x4] sm:$0xf]
    %v549 = vld [vmem:[%s2 + $0x8] sm:$0xf]
    %v550 = vld [vmem:[%s2 + $0xc] sm:$0xf]
    %v551 = vld [vmem:[%s2 + $0x10] sm:$0xf]
    %v552 = vld [vmem:[%s2 + $0x14] sm:$0xf]
    %v553 = vld [vmem:[%s2 + $0x18] sm:$0xf]
    %v554 = vld [vmem:[%s2 + $0x1c] sm:$0xf]
    %v555 = vld [vmem:[%s3] sm:$0x1]
    %v557 = vlaneseq
    %v558 = vshrl.u32 %v557, 7
    %v559 = vsub.s32 0, %v558
    %v560 = vrot.slane %v555, %v559
    %v570 = vunpack.c.l.b16 %v547
    %v571 = vunpack.c.l.b16 %v548
    %v572 = vunpack.c.l.b16 %v549
    %v573 = vunpack.c.l.b16 %v550
    %v574 = vunpack.c.l.b16 %v551
    %v575 = vunpack.c.l.b16 %v552
    %v576 = vunpack.c.l.b16 %v553
    %v577 = vunpack.c.l.b16 %v554
    %v578 = vpack.c.b16 %v571, %v570
    %v579 = vpack.c.b16 %v573, %v572
    %v580 = vpack.c.b16 %v575, %v574
    %v581 = vpack.c.b16 %v577, %v576
    %vm586 = vcmask 523264
    %v588 = vsel %vm586, %v546, 0
    %590 = vmatprep.subr.bf16.mxu0 0
    %591 = vmatpush1.bf16.msra.mxu0 %v578
    %592 = vmatprep.subr.bf16.mxu0 0
    %593 = vmatpush1.bf16.msra.mxu0 %v579
    %594 = vmatprep.subr.bf16.mxu0 0
    %595 = vmatpush1.bf16.msra.mxu0 %v580
    %596 = vmatprep.subr.bf16.mxu0 0
    %597 = vmatpush1.bf16.msra.mxu0 %v581
    %598 = vmatprep.subr.bf16.mxu0 0
    %599 = vmatpush1.bf16.msra.mxu0 0
    %600 = vmatprep.subr.bf16.mxu0 0
    %601 = vmatpush1.bf16.msra.mxu0 0
    %602 = vmatprep.subr.bf16.mxu0 0
    %603 = vmatpush1.bf16.msra.mxu0 0
    %604 = vmatprep.subr.bf16.mxu0 0
    %605 = vmatpush1.bf16.msra.mxu0 0
    %606 = vmatprep.subr.bf16.mxu0 0
    %607 = vmatpush1.bf16.msra.mxu0 0
    %608 = vmatprep.subr.bf16.mxu0 0
    %609 = vmatpush1.bf16.msra.mxu0 0
    %610 = vmatprep.subr.bf16.mxu0 0
    %611 = vmatpush1.bf16.msra.mxu0 0
    %612 = vmatprep.subr.bf16.mxu0 0
    %613 = vmatpush1.bf16.msra.mxu0 0
    %614 = vmatprep.subr.bf16.mxu0 0
    %615 = vmatpush1.bf16.msra.mxu0 0
    %616 = vmatprep.subr.bf16.mxu0 0
    %617 = vmatpush1.bf16.msra.mxu0 0
    %618 = vmatprep.subr.bf16.mxu0 0
    %619 = vmatpush1.bf16.msra.mxu0 0
    %620 = vmatprep.subr.bf16.mxu0 0
    %621 = vmatpush1.bf16.msra.mxu0 0
    %622 = vmatprep.mubr.bf16.mxu0 0
    %623 = vmatmul.mubr.bf16.gmra.mrb[0].mxu0 %v588
    %v624 = vpop.f32.mrb[0].mxu0
    %v625 = vadd.f32 %v560, %v624
    %v626 = vpop.f32.mrb[0].mxu0
    %v627 = vpop.f32.mrb[0].mxu0
    %v628 = vpop.f32.mrb[0].mxu0
    %629 = vdwg.mxu0
    %v630 = vtanh.pop %v625
    %v631 = vpack.c.bf16 %v630, %v630
    %v632 = vld [vmem:[%s4] sm:$0xf]
    %v633 = vld [vmem:[%s4 + $0x4] sm:$0xf]
    %v634 = vld [vmem:[%s4 + $0x8] sm:$0xf]
    %v635 = vld [vmem:[%s4 + $0xc] sm:$0xf]
    %v636 = vld [vmem:[%s5] sm:$0x1]
    %v638 = vlaneseq
    %v639 = vshrl.u32 %v638, 7
    %v640 = vsub.s32 0, %v639
    %v641 = vrot.slane %v636, %v640
    %v647 = vunpack.c.l.b16 %v632
    %v648 = vunpack.c.l.b16 %v633
    %v649 = vunpack.c.l.b16 %v634
    %v650 = vunpack.c.l.b16 %v635
    %v651 = vpack.c.b16 %v648, %v647
    %v652 = vpack.c.b16 %v650, %v649
    %v656 = vsel %vm146, %v631, 0
    %658 = vmatprep.subr.bf16.mxu0 0
    %659 = vmatpush1.bf16.msra.mxu0 %v651
    %660 = vmatprep.subr.bf16.mxu0 0
    %661 = vmatpush1.bf16.msra.mxu0 %v652
    %662 = vmatprep.subr.bf16.mxu0 0
    %663 = vmatpush1.bf16.msra.mxu0 0
    %664 = vmatprep.subr.bf16.mxu0 0
    %665 = vmatpush1.bf16.msra.mxu0 0
    %666 = vmatprep.subr.bf16.mxu0 0
    %667 = vmatpush1.bf16.msra.mxu0 0
    %668 = vmatprep.subr.bf16.mxu0 0
    %669 = vmatpush1.bf16.msra.mxu0 0
    %670 = vmatprep.subr.bf16.mxu0 0
    %671 = vmatpush1.bf16.msra.mxu0 0
    %672 = vmatprep.subr.bf16.mxu0 0
    %673 = vmatpush1.bf16.msra.mxu0 0
    %674 = vmatprep.subr.bf16.mxu0 0
    %675 = vmatpush1.bf16.msra.mxu0 0
    %676 = vmatprep.subr.bf16.mxu0 0
    %677 = vmatpush1.bf16.msra.mxu0 0
    %678 = vmatprep.subr.bf16.mxu0 0
    %679 = vmatpush1.bf16.msra.mxu0 0
    %680 = vmatprep.subr.bf16.mxu0 0
    %681 = vmatpush1.bf16.msra.mxu0 0
    %682 = vmatprep.subr.bf16.mxu0 0
    %683 = vmatpush1.bf16.msra.mxu0 0
    %684 = vmatprep.subr.bf16.mxu0 0
    %685 = vmatpush1.bf16.msra.mxu0 0
    %686 = vmatprep.subr.bf16.mxu0 0
    %687 = vmatpush1.bf16.msra.mxu0 0
    %688 = vmatprep.subr.bf16.mxu0 0
    %689 = vmatpush1.bf16.msra.mxu0 0
    %690 = vmatprep.mubr.bf16.mxu0 0
    %691 = vmatmul.mubr.bf16.gmra.mrb[0].mxu0 %v656
    %v692 = vpop.f32.mrb[0].mxu0
    %v693 = vadd.f32 %v641, %v692
    %v694 = vpop.f32.mrb[0].mxu0
    %v695 = vpop.f32.mrb[0].mxu0
    %v696 = vpop.f32.mrb[0].mxu0
    %697 = vdwg.mxu0
    %698 = vmax.xlane.f32.xlu0 %v693
    %v699 = vpop.xlane.xlu0 %698
    %v700 = vsub.f32 %v693, %v699
    %v701 = vmul.f32 %v700, 1.442695
    %v702 = vpow.pop %v701
    %703 = vadd.xlane.f32.xlu0 %v702
    %v704 = vpop.xlane.xlu0 %703
    %v705 = vlog2.pop %v704
    %v706 = vmul.f32 %v705, 0.6931472
    %v707 = vsub.f32 %v700, %v706
    %708 = vst [vmem:[#allocation5] sm:$0xff] %v707
    // Predicated region
    $region30: #{tpu_custom_call.1} parent=1 // pred_check
      _
    $region31: #{tpu_custom_call.1} parent=1 // pred_check_branch
      %710 = sbr.rel (0) target = $region33
    $region32: #{tpu_custom_call.1} parent=1 // pred_region
      %s712 = ssub.s32 128, 128
      %713 = vsyncadd [#allocation4], %s712
      %s715 = sshll.u32 [#allocation5], 4
      %s716 = int_to_ptr.vmem [resolvable:$true] %s715
      %718 = dma.vmem_to_hbm [thread:$0]  %s716, 128, %s6, [#allocation4]
    $region33: #{tpu_custom_call.1} parent=1 // pred_fallthru
      _
    // Predicated region
    $region34: #{tpu_custom_call.1} parent=1 // pred_check
      _
    $region35: #{tpu_custom_call.1} parent=1 // pred_check_branch
      %720 = sbr.rel (0) target = $region37
    $region36: #{tpu_custom_call.1} parent=1 // pred_region
      %721 = dma.done [#allocation4], 128
    $region37: #{tpu_custom_call.1} parent=1 // pred_fallthru
      _
    %722 = vsyncpa [#allocation3], 1
    %723 = vsyncpa [#allocation4], 1

</llo_original>
